<compile_context>
chip_gen: v6e
topology: v6e:2x2x1
jax: 0.10.0
libtpu: 0.0.40
codegen_flags: <defaults>
</compile_context>

<pallas_src>
import jax
import jax.numpy as jnp
from jax.experimental import pallas as pl
from jax.experimental.pallas import tpu as pltpu

_LANE = 128          # vreg lane width: last dim of every block is 128 (unmasked vst)
_SUBLANE = 8         # sublane granularity: second-last dim multiple of 8
_MAX_TILE_ROWS = 512 # 512*128*4B = 256 KiB / buffer -> tiny VMEM footprint on all chips


def _round_up(x: int, m: int) -> int:
    return ((x + m - 1) // m) * m


# ----------------------------------------------------------------------------
# Kernel: Box-Muller transform of two uniform tiles -> one gaussian tile.
# u1 in (0, 1], u2 in [0, 1).  z = sqrt(-2 ln u1) * cos(2*pi*u2)  ~ N(0, 1)
# ----------------------------------------------------------------------------
def _randn_kernel(u1_ref, u2_ref, o_ref):
    u1 = u1_ref[...]
    u2 = u2_ref[...]
    r = jnp.sqrt(-2.0 * jnp.log(u1))
    theta = (2.0 * jnp.pi) * u2
    o_ref[...] = r * jnp.cos(theta)


def _pallas_randn(key: jax.Array, batch_size: int, n_slots: int,
                  var_size: int) -> jax.Array:
    total = batch_size * n_slots * var_size

    # Lane-dense, sublane-aligned 2D slab; tile the row axis.
    rows = _round_up(pl.cdiv(total, _LANE), _SUBLANE)
    tile_rows = min(rows, _MAX_TILE_ROWS)
    rows = _round_up(rows, tile_rows)
    grid = (rows // tile_rows,)
    shape2d = (rows, _LANE)

    k1, k2 = jax.random.split(key)
    # Avoid u1 == 0 so log(u1) is finite.
    u1 = jax.random.uniform(k1, shape2d, jnp.float32,
                            minval=jnp.finfo(jnp.float32).tiny, maxval=1.0)
    u2 = jax.random.uniform(k2, shape2d, jnp.float32)

    spec = pl.BlockSpec((tile_rows, _LANE), lambda i: (i, 0))
    noise2d = pl.pallas_call(
        _randn_kernel,
        out_shape=jax.ShapeDtypeStruct(shape2d, jnp.float32),
        grid=grid,
        in_specs=[spec, spec],
        out_specs=spec,
        compiler_params=pltpu.CompilerParams(
            dimension_semantics=("parallel",)),   # split tiles across TCs on v7x
    )(u1, u2)

    # Restore the PyTorch-facing (b, n_slots, var_size) view in the wrapper.
    return noise2d.reshape(-1)[:total].reshape(batch_size, n_slots, var_size)


# ----------------------------------------------------------------------------
# Module wrapper
# ----------------------------------------------------------------------------
class DummyEncoder:
    """JAX/Pallas port of tests/models/test_neural_production_system.DummyEncoder."""

    def __init__(self, batch_size: int, n_slots: int, var_size: int):
        self.batch_size = batch_size
        self.n_slots = n_slots
        self.var_size = var_size
        # No learned parameters in this module.

    def __call__(self, x, vars=None, *, key=None):
        if vars is not None:
            # Identity pass-through.  Per perf review: do NOT launch a copy
            # kernel here — it would only add HBM read+write traffic and
            # launch overhead for zero work.
            return vars
        if key is None:
            key = jax.random.PRNGKey(0)
        # torch.randn equivalent (same N(0,1) distribution, different RNG
        # stream), drawn with an in-kernel Box-Muller transform.
        return _pallas_randn(key, self.batch_size, self.n_slots, self.var_size)


if __name__ == "__main__":
    # Small shapes consistent with the module's constructor arguments.
    batch_size, n_slots, var_size = 2, 4, 32

    key = jax.random.PRNGKey(0)
    kx, kv, kn = jax.random.split(key, 3)
    # `x` is accepted but unused by the forward pass (matches the PyTorch module).
    x = jax.random.normal(kx, (batch_size, 4, 16, 16), dtype=jnp.float32)
    vars_in = jax.random.normal(kv, (batch_size, n_slots, var_size), dtype=jnp.float32)

    enc = DummyEncoder(batch_size, n_slots, var_size)

    # Branch 1: vars is provided -> identity pass-through (no kernel, per review).
    out = enc(x, vars_in)
    out = jax.block_until_ready(out)
    assert out.shape == (batch_size, n_slots, var_size)
    assert jnp.allclose(out, vars_in), "identity pass-through mismatch"

    # Branch 2: vars is None -> gaussian noise via the Pallas Box-Muller kernel.
    noise = enc(x, None, key=kn)
    noise = jax.block_until_ready(noise)
    assert noise.shape == (batch_size, n_slots, var_size)
    assert bool(jnp.all(jnp.isfinite(noise))), "non-finite gaussian samples"
    # Loose sanity check on the distribution (mean ~ 0, std ~ 1).
    assert abs(float(jnp.mean(noise))) < 0.5
    assert 0.5 < float(jnp.std(noise)) < 1.5

    print("KERNEL_OK")
</pallas_src>

<mosaic_0001>
module attributes {stable_mosaic.version = 11 : i64} {
  func.func @_randn_kernel(%arg0: i32, %arg1: memref<8x128xf32, #tpu.memory_space<vmem>>, %arg2: memref<8x128xf32, #tpu.memory_space<vmem>>, %arg3: memref<8x128xf32, #tpu.memory_space<vmem>>) attributes {dimension_semantics = [#tpu.dimension_semantics<parallel>], iteration_bounds = array<i64: 1>, scalar_prefetch = 0 : i64, scratch_operands = 0 : i64, tpu.core_type = #tpu.core_type<tc>, window_params = [{transform_indices = @transform_0, window_bounds = array<i64: 8, 128>}, {transform_indices = @transform_1, window_bounds = array<i64: 8, 128>}, {transform_indices = @transform_2, window_bounds = array<i64: 8, 128>}]} {
    %c0 = arith.constant 0 : index
    %c0_0 = arith.constant 0 : index
    %0 = vector.load %arg1[%c0, %c0_0] : memref<8x128xf32, #tpu.memory_space<vmem>>, vector<8x128xf32>
    %c0_1 = arith.constant 0 : index
    %c0_2 = arith.constant 0 : index
    %1 = vector.load %arg2[%c0_1, %c0_2] : memref<8x128xf32, #tpu.memory_space<vmem>>, vector<8x128xf32>
    %2 = math.log %0 : vector<8x128xf32>
    %cst = arith.constant -2.000000e+00 : f32
    %3 = vector.broadcast %cst : f32 to vector<8x128xf32>
    %4 = arith.mulf %3, %2 : vector<8x128xf32>
    %5 = math.sqrt %4 : vector<8x128xf32>
    %cst_3 = arith.constant 6.28318548 : f32
    %6 = vector.broadcast %cst_3 : f32 to vector<8x128xf32>
    %7 = arith.mulf %6, %1 : vector<8x128xf32>
    %8 = math.cos %7 : vector<8x128xf32>
    %9 = arith.mulf %5, %8 : vector<8x128xf32>
    %c0_4 = arith.constant 0 : index
    %c0_5 = arith.constant 0 : index
    %10 = vector.load %arg3[%c0_4, %c0_5] : memref<8x128xf32, #tpu.memory_space<vmem>>, vector<8x128xf32>
    tpu.vector_store %arg3[%c0_4, %c0_5], %9 {strides = array<i32>} : memref<8x128xf32, #tpu.memory_space<vmem>>, vector<8x128xf32>,
    return
  }
  func.func @transform_0(%arg0: i32) -> (i32, i32) {
    %c0_i32 = arith.constant 0 : i32
    %c0_i32_0 = arith.constant 0 : i32
    return %arg0, %c0_i32 : i32, i32
  }
  func.func @transform_1(%arg0: i32) -> (i32, i32) {
    %c0_i32 = arith.constant 0 : i32
    %c0_i32_0 = arith.constant 0 : i32
    return %arg0, %c0_i32 : i32, i32
  }
  func.func @transform_2(%arg0: i32) -> (i32, i32) {
    %c0_i32 = arith.constant 0 : i32
    %c0_i32_0 = arith.constant 0 : i32
    return %arg0, %c0_i32 : i32, i32
  }
}

</mosaic_0001>

<llo_original>
// kernel: tpu_custom_call.1
$region0: #{tpu_custom_call.1}
  #allocation0 [shape = 'u32[]', space=smem, size = 0x4, offset = 0x4, fixed_abs, tag = 'smem constant byte address 0x4 - core index']
  #allocation1 [shape = 'u32[144,128]{1,0:T(1,128)}', space=vmem, size = 0x12000, scoped, tag = 'internal scratch']
  %s0 = inlined_call_operand.hbm [shape: f32[8,128], index: 0, kind: input, shape index: {}]
  %s1 = inlined_call_operand.hbm [shape: f32[8,128], index: 1, kind: input, shape index: {}]
  %s2 = inlined_call_operand.hbm [shape: f32[8,128], index: 2, kind: output, shape index: {}]
  %s3 = sld [smem:[#allocation0]]
  $region26: #{tpu_custom_call.1} parent=0
    _
  %s5 = ssub.s32 1, %s3
  %s6 = scalar_select 0, %s5, %s3
  $region1: #{tpu_custom_call.1} parent=0
    #allocation2 [shape = 'u8[4096]{0}', space=vmem, size = 0x1000, scoped, tag = 'input window, operand 0, single buffered']
    #allocation3 [shape = 's32[1]{0}', space=sflag, size = 0x4, scoped, tag = 'scoped memory for tpu_custom_call.1']
    #allocation4 [shape = 's32[1]{0}', space=sflag, size = 0x4, scoped, tag = 'scoped memory for tpu_custom_call.1']
    #allocation5 [shape = 'u8[4096]{0}', space=vmem, size = 0x1000, scoped, tag = 'input window, operand 1, single buffered']
    #allocation6 [shape = 's32[1]{0}', space=sflag, size = 0x4, scoped, tag = 'scoped memory for tpu_custom_call.1']
    #allocation7 [shape = 'u8[4096]{0}', space=vmem, size = 0x1000, scoped, tag = 'output window, operand 0, single buffered']
    %7 = vsyncpa [#allocation3], 0
    %8 = vsyncpa [#allocation6], 0
    %9 = vsyncpa [#allocation4], 0
    // Predicated region
    $region2: #{tpu_custom_call.1} parent=1 // pred_check
      _
    $region3: #{tpu_custom_call.1} parent=1 // pred_check_branch
      %11 = sbr.rel (0) target = $region5
    $region4: #{tpu_custom_call.1} parent=1 // pred_region
      %s13 = ssub.s32 128, 128
      %14 = vsyncadd [#allocation3], %s13
      %s16 = sshll.u32 [#allocation2], 4
      %s17 = int_to_ptr.vmem [resolvable:$true] %s16
      %19 = dma.hbm_to_vmem [thread:$0]  %s0, 128, %s17, [#allocation3]
    $region5: #{tpu_custom_call.1} parent=1 // pred_fallthru
      _
    // Predicated region
    $region6: #{tpu_custom_call.1} parent=1 // pred_check
      _
    $region7: #{tpu_custom_call.1} parent=1 // pred_check_branch
      %21 = sbr.rel (0) target = $region9
    $region8: #{tpu_custom_call.1} parent=1 // pred_region
      %s23 = ssub.s32 128, 128
      %24 = vsyncadd [#allocation6], %s23
      %s26 = sshll.u32 [#allocation5], 4
      %s27 = int_to_ptr.vmem [resolvable:$true] %s26
      %29 = dma.hbm_to_vmem [thread:$0]  %s1, 128, %s27, [#allocation6]
    $region9: #{tpu_custom_call.1} parent=1 // pred_fallthru
      _
    // Predicated region
    $region10: #{tpu_custom_call.1} parent=1 // pred_check
      _
    $region11: #{tpu_custom_call.1} parent=1 // pred_check_branch
      %31 = sbr.rel (0) target = $region13
    $region12: #{tpu_custom_call.1} parent=1 // pred_region
      %32 = dma.done [#allocation3], 128
    $region13: #{tpu_custom_call.1} parent=1 // pred_fallthru
      _
    // Predicated region
    $region14: #{tpu_custom_call.1} parent=1 // pred_check
      _
    $region15: #{tpu_custom_call.1} parent=1 // pred_check_branch
      %34 = sbr.rel (0) target = $region17
    $region16: #{tpu_custom_call.1} parent=1 // pred_region
      %35 = dma.done [#allocation6], 128
    $region17: #{tpu_custom_call.1} parent=1 // pred_fallthru
      _
    %v36 = vld [vmem:[#allocation2] sm:$0xff]
    %v37 = vld [vmem:[#allocation5] sm:$0xff]
    %v38 = vlog2.pop %v36
    %v39 = vmul.f32 %v38, 0.6931472
    %v40 = vmul.f32 %v39, -2.0
    %v41 = vrsqrt.pop %v40
    %v42 = vmul.f32 %v40, %v41
    %vm43 = vcmp.eq.f32.partialorder %v40, inf
    %v44 = vsel %vm43, %v40, %v42
    %vm45 = vcmp.eq.f32.partialorder %v40, 0.0
    %v46 = vand.u32 %v40, 2147483648
    %v47 = vsel %vm45, %v46, %v44
    %v48 = vmul.f32 %v37, 6.2831855
    %v49 = vand.u32 2147483647, %v48
    %vm50 = vcmp.le.f32.partialorder %v49, 0.7853982
    %vm51 = vcmp.lt.s32.totalorder %v48, 0
    %v52 = vand.u32 %v48, 2139095040
    %v53 = vshrl.u32 %v52, 23
    %v54 = vsub.s32 %v53, 127
    %v55 = vand.u32 2147483647, %v48
    %v56 = vand.u32 %v55, 8388607
    %v57 = vor.u32 %v56, 8388608
    %v58 = vsub.s32 0, %v57
    %v59 = vadd.s32 %v54, 1
    %vm60 = vcmp.gt.s32.totalorder %v59, 0
    %v61 = vsel %vm60, %v59, 0
    %v62 = vshrl.u32 %v61, 5
    %v63 = vand.u32 %v61, 31
    %v64 = vsub.s32 32, %v63
    %v65 = vshrl.u32 683565275, %v64
    %v66 = vshll.u32 683565275, %v63
    %v67 = vshrl.u32 2475754826, %v64
    %v68 = vor.u32 %v66, %v67
    %v69 = vshll.u32 2475754826, %v63
    %v70 = vshrl.u32 2131351028, %v64
    %v71 = vor.u32 %v69, %v70
    %v72 = vshll.u32 2131351028, %v63
    %v73 = vshrl.u32 2102212464, %v64
    %v74 = vor.u32 %v72, %v73
    %v75 = vshll.u32 2102212464, %v63
    %v76 = vshrl.u32 920167782, %v64
    %v77 = vor.u32 %v75, %v76
    %v78 = vshll.u32 920167782, %v63
    %v79 = vshrl.u32 1326507024, %v64
    %v80 = vor.u32 %v78, %v79
    %vm81 = vcmp.lt.s32.totalorder %v62, 1
    %vm82 = vcmp.lt.s32.totalorder %v62, 2
    %vm83 = vcmp.lt.s32.totalorder %v62, 3
    %vm84 = vcmp.lt.s32.totalorder %v62, 4
    %v85 = vsel %vm81, %v65, %v68
    %v86 = vsel %vm84, %v74, 2102212464
    %v87 = vsel %vm83, %v71, %v86
    %v88 = vsel %vm82, %v85, %v87
    %v89 = vsel %vm81, %v68, %v71
    %v90 = vsel %vm84, %v77, 920167782
    %v91 = vsel %vm83, %v74, %v90
    %v92 = vsel %vm82, %v89, %v91
    %v93 = vsel %vm81, %v71, %v74
    %v94 = vsel %vm84, %v80, 1326507024
    %v95 = vsel %vm83, %v77, %v94
    %v96 = vsel %vm82, %v93, %v95
    %v97 = vshll.u32 %v57, 8
    %v98 = vmul.u32.u64.compose %v97, %v96
    %v99 = vextract.low.u32 %v98
    %v100 = vextract.high.u32 %v98
    %v101 = vmul.u32.u64.compose %v97, %v92
    %v102 = vextract.low.u32 %v101
    %v103 = vextract.high.u32 %v101
    %v104 = vmul.u32 %v97, %v88
    %v105 = vadd.s32 %v100, %v102
    %vm106 = vc.u32 %v100, %v102
    %v107 = vadd.s32 %v103, 1
    %v108 = vsel %vm106, %v107, %v103
    %v109 = vadd.s32 %v104, %v108
    %v110 = vadd.s32 %v109, 536870912
    %v111 = vshrl.u32 %v110, 30
    %v112 = vshll.u32 %v111, 30
    %v113 = vsub.s32 %v109, %v112
    %vm114 = vcmp.lt.s32.totalorder %v113, 0
    %v115 = vsub.s32 0, %v113
    %v116 = vsel %vm114, %v115, %v113
    %v117 = vclz %v116
    %v118 = vsub.s32 %v117, 2
    %vm119 = vcmp.gt.s32.totalorder 0, %v118
    %v120 = vsel %vm119, 0, %v118
    %v121 = vsub.s32 32, %v120
    %v122 = vshll.u32 %v113, %v120
    %v123 = vshrl.u32 %v105, %v121
    %v124 = vor.u32 %v122, %v123
    %v125 = vsub.s32 4294967266, %v120
    %v126 = vadd.s32 %v125, 127
    %v127 = vshll.u32 %v126, 23
    %v128 = vor.u32 4788187, %v127
    %v129 = vand.u32 2147483647, %v128
    %v131 = vcvt.s32.f32 %v124
    %v132 = vmul.f32 %v131, %v129
    %v133 = vxor.u32 %v132, 2147483648
    %v134 = vsel %vm51, %v133, %v132
    %v135 = vsub.s32 4, %v111
    %v136 = vsel %vm51, %v135, %v111
    %v137 = vsel %vm50, %v48, %v134
    %v138 = vsel %vm50, 0, %v136
    %v139 = vcosq.f32.pop %v137
    %v140 = vsinq.f32.pop %v137
    %vm141 = vweird.f32 %v48
    %v142 = vand.u32 %v138, 3
    %vm143 = vcmp.lt.s32.totalorder %v142, 2
    %vm144 = vcmp.eq.s32.totalorder %v142, 0
    %v145 = vxor.u32 %v140, 2147483648
    %v146 = vsel %vm144, %v139, %v145
    %vm147 = vcmp.eq.s32.totalorder %v142, 2
    %v148 = vxor.u32 %v139, 2147483648
    %v149 = vsel %vm147, %v148, %v140
    %v150 = vsel %vm143, %v146, %v149
    %v151 = vsel %vm141, nan, %v150
    %v152 = vmul.f32 %v47, %v151
    %153 = vst [vmem:[#allocation7] sm:$0xff] %v152
    // Predicated region
    $region18: #{tpu_custom_call.1} parent=1 // pred_check
      _
    $region19: #{tpu_custom_call.1} parent=1 // pred_check_branch
      %155 = sbr.rel (0) target = $region21
    $region20: #{tpu_custom_call.1} parent=1 // pred_region
      %s157 = ssub.s32 128, 128
      %158 = vsyncadd [#allocation4], %s157
      %s160 = sshll.u32 [#allocation7], 4
      %s161 = int_to_ptr.vmem [resolvable:$true] %s160
      %163 = dma.vmem_to_hbm [thread:$0]  %s161, 128, %s2, [#allocation4]
    $region21: #{tpu_custom_call.1} parent=1 // pred_fallthru
      _
    // Predicated region
    $region22: #{tpu_custom_call.1} parent=1 // pred_check
      _
    $region23: #{tpu_custom_call.1} parent=1 // pred_check_branch
      %165 = sbr.rel (0) target = $region25
    $region24: #{tpu_custom_call.1} parent=1 // pred_region
      %166 = dma.done [#allocation4], 128
    $region25: #{tpu_custom_call.1} parent=1 // pred_fallthru
      _
    %167 = vsyncpa [#allocation3], 1
    %168 = vsyncpa [#allocation6], 1
    %169 = vsyncpa [#allocation4], 1

</llo_original>
